<compile_context>
chip_gen: v5e
topology: v5e:2x2
jax: 0.10.0
libtpu: 0.0.40
codegen_flags: <defaults>
</compile_context>

<pallas_src>
import functools

import jax
import jax.numpy as jnp
from jax.experimental import pallas as pl
from jax.experimental.pallas import tpu as pltpu


def _round_up(x, m):
    return ((x + m - 1) // m) * m


def _cdiv(a, b):
    return -(-a // b)


def _vmem_budgets():
    """(tile-sizing budget, vmem_limit_bytes), chosen per chip generation.

    128-MiB-VMEM chips (v4/v5e/v5p/v6e) get a large budget so tiles reach the
    ~512-row regime (~85% of HBM roofline); v7x (64 MiB per TensorCore) and
    unknown chips keep the conservative 28 MiB budget / 40 MiB limit; old
    16-MiB-VMEM chips (v2/v3) get a small safe budget.
    """
    kind = ""
    try:
        kind = jax.devices()[0].device_kind.lower()
    except Exception:  # pragma: no cover - defensive; fall through to default
        pass
    if "v2" in kind or "v3" in kind:
        return 8 << 20, 14 << 20
    if "v4" in kind or "v5" in kind or "v6" in kind:
        return 80 << 20, 108 << 20
    return 28 << 20, 40 << 20


def _choose_tiling(S, max_rows, n_cls):
    """Pick (tile_s, n_shards, steps, S_pad, use_int8_labels).

    * tile_s is a multiple of 8 (32 when int8 labels are used) so the in-kernel
      8-row fold and the (8,128)/(32,128) layout constraints always hold.
    * A 2-way split over the leading 'parallel' grid axis is used whenever there
      is enough work: on v7x it puts one half on each TensorCore; on single-TC
      v5e/v6e it is near-neutral.
    * The grid is cdiv-based; rows past the real extent are fully masked
      in-kernel, so tile_s never has to divide S (no full-extent fallback).
    """
    max_rows = max(8, min(1024, max_rows))
    n_shards = 2 if S > 8 else 1
    rows_per_shard = _cdiv(S, n_shards)
    if rows_per_shard <= max_rows:
        tile_s = _round_up(rows_per_shard, 8)
        steps = 1
    else:
        tile_s = (max_rows // 8) * 8
        if n_cls <= 127 and tile_s >= 32:
            tile_s = (tile_s // 32) * 32        # int8 label blocks want 32-row tiles
        steps = _cdiv(rows_per_shard, tile_s)
    use_i8 = (n_cls <= 127) and (tile_s % 32 == 0)
    return tile_s, n_shards, steps, n_shards * steps * tile_s, use_i8


def _iou_bce_kernel(pred_ref, tgt_ref, inter_ref, psum_ref, ysum_ref, bce_ref,
                    *, steps, tile_rows, n_pix):
    """Accumulates per-class (8,128) partials for intersection, sum(prob),
    sum(one-hot) and the BCE-with-logits sum.  Output blocks are VMEM-resident
    accumulators across the inner ('arbitrary') grid axis."""
    i = pl.program_id(1)

    @pl.when(i == 0)
    def _init():
        inter_ref[...] = jnp.zeros_like(inter_ref)
        psum_ref[...] = jnp.zeros_like(psum_ref)
        ysum_ref[...] = jnp.zeros_like(ysum_ref)
        bce_ref[...] = jnp.zeros_like(bce_ref)

    x = pred_ref[...]                                   # (B, C, T, 128) native dtype
    B, C, T, L = x.shape

    # Pixel-validity mask: masks both the H*W->128 padding tail and whole padded
    # tiles added to even out the cdiv grid / 2-way shard split.
    base_row = (pl.program_id(0) * steps + i) * tile_rows
    rows = jax.lax.broadcasted_iota(jnp.int32, (T, L), 0)
    lanes = jax.lax.broadcasted_iota(jnp.int32, (T, L), 1)
    valid = ((base_row + rows) * 128 + lanes) < n_pix   # (T, L) bool
    mask_f = valid.astype(jnp.float32)
    # Invalid pixels get label -1 -> one-hot is all-zero for every class.
    t = jnp.where(valid, tgt_ref[...].astype(jnp.int32), -1)   # (B, T, 128)

    def rsum8(v):
        # (B, T, L) -> (8, L): cross-vreg VPU adds only (view-preserving reshape);
        # the 8->1 sublane and 128->1 lane reductions are deferred to JAX.
        return jnp.sum(v.reshape(B, T // 8, 8, L), axis=(0, 1))

    # ---- pass 1: class-axis running max (VPU; per-class upcast, no big temp) ----
    m = x[:, 0].astype(jnp.float32)
    for c in range(1, C):
        m = jnp.maximum(m, x[:, c].astype(jnp.float32))

    # ---- pass 2 (fused): per-class exp + BCE + one-hot, accumulated immediately.
    # Only e_c (needed again for the probabilities) stays live across passes.
    denom = jnp.zeros_like(m)
    es = []
    bce_parts = []
    ysum_parts = []
    for c in range(C):
        xc = x[:, c].astype(jnp.float32)                 # (B, T, L)
        yc = (t == c).astype(jnp.float32)                # already masked via t = -1
        ec = jnp.exp(xc - m)                             # EUP
        denom = denom + ec
        es.append(ec)
        # binary_cross_entropy_with_logits: max(x,0) - x*y + log1p(exp(-|x|));
        # masked so padded (zero) logits do not contribute log(2).
        bce_c = (jnp.maximum(xc, 0.0) - xc * yc
                 + jnp.log1p(jnp.exp(-jnp.abs(xc)))) * mask_f
        bce_parts.append(rsum8(bce_c))
        ysum_parts.append(rsum8(yc))

    # ---- pass 3: probabilities need the full denominator.  One approx EUP
    # reciprocal + a VPU Newton step replaces a per-element divide; the pixel
    # mask is folded into `inv` once so prob contributions are masked for free.
    inv = pl.reciprocal(denom, approx=True)
    inv = (inv * (2.0 - denom * inv)) * mask_f

    inter_parts = []
    psum_parts = []
    for c in range(C):
        pc = es[c] * inv                                 # masked softmax prob
        psum_parts.append(rsum8(pc))
        inter_parts.append(rsum8(pc * (t == c).astype(jnp.float32)))

    inter_ref[...] += jnp.stack(inter_parts)[None]       # (1, C, 8, 128)
    psum_ref[...] += jnp.stack(psum_parts)[None]
    ysum_ref[...] += jnp.stack(ysum_parts)[None]
    bce_ref[...] += jnp.stack(bce_parts)[None]


def iou_bce_loss(pred, target, *, n_cls, alpha=0.25, eps=1e-7, log_loss=True):
    """pred: (B, n_cls, H, W) float logits (NCHW, any float dtype);
       target: (B, H, W) integer class labels in [0, n_cls)."""
    # TODO(synk): use_ce=True branch (weighted F.cross_entropy) not implemented;
    #             the module default use_ce=False (BCE path) is what runs here.
    B, C, H, W = pred.shape
    assert C == n_cls
    P = H * W
    S = _cdiv(P, 128)

    vmem_budget, vmem_limit = _vmem_budgets()
    # Bytes per 128-pixel spatial row across batch & classes: double-buffered
    # inputs + fused-kernel temps (e_c per class + a few row-sized scalars).
    in_row = B * (C * 128 * pred.dtype.itemsize + 128 * 4)
    tmp_row = (C + 8) * B * 128 * 4
    max_rows = int(vmem_budget // (2 * in_row + tmp_row))
    tile_s, n_shards, steps, S_pad, use_i8 = _choose_tiling(S, max_rows, n_cls)

    # Flatten spatial, pad to the grid extent; padded pixels are masked in-kernel.
    P_pad = S_pad * 128
    tgt_dtype = jnp.int8 if use_i8 else jnp.int32
    pred_flat = pred.reshape(B, C, P)
    tgt_flat = target.reshape(B, P).astype(tgt_dtype)
    if P_pad > P:
        # TODO(synk): this pad is one extra HBM copy when H*W is not already
        #             aligned to the grid; contributions are masked in-kernel.
        pred_flat = jnp.pad(pred_flat, ((0, 0), (0, 0), (0, P_pad - P)))
        tgt_flat = jnp.pad(tgt_flat, ((0, 0), (0, P_pad - P)))
    pred_r = pred_flat.reshape(B, C, S_pad, 128)
    tgt_r = tgt_flat.reshape(B, S_pad, 128)

    out_shapes = tuple(
        jax.ShapeDtypeStruct((n_shards, C, 8, 128), jnp.float32) for _ in range(4))
    acc_spec = pl.BlockSpec((1, C, 8, 128), lambda p, i: (p, 0, 0, 0))

    kernel = functools.partial(_iou_bce_kernel, steps=steps, tile_rows=tile_s,
                               n_pix=P)

    inter_p, psum_p, ysum_p, bce_p = pl.pallas_call(
        kernel,
        out_shape=out_shapes,
        grid_spec=pltpu.PrefetchScalarGridSpec(
            num_scalar_prefetch=0,
            grid=(n_shards, steps),
            in_specs=[
                pl.BlockSpec((B, C, tile_s, 128),
                             lambda p, i: (0, 0, p * steps + i, 0)),
                pl.BlockSpec((B, tile_s, 128),
                             lambda p, i: (0, p * steps + i, 0)),
            ],
            out_specs=(acc_spec, acc_spec, acc_spec, acc_spec),
        ),
        compiler_params=pltpu.CompilerParams(
            dimension_semantics=("parallel", "arbitrary"),
            vmem_limit_bytes=vmem_limit),
    )(pred_r, tgt_r)

    # Tiny finalize in JAX: fold shard/sublane/lane partials into the scalar loss.
    inter = jnp.sum(inter_p, axis=(0, 2, 3))                      # (C,)
    ysum = jnp.sum(ysum_p, axis=(0, 2, 3))                        # (C,)
    card = jnp.sum(psum_p, axis=(0, 2, 3)) + ysum                 # (C,)
    union = card - inter
    jaccard = inter / jnp.maximum(union, eps)
    if log_loss:
        iou_loss = -jnp.log(jnp.maximum(jaccard, eps))
    else:
        iou_loss = 1.0 - jaccard
    mask = (ysum > 0.0).astype(jnp.float32)
    iou_mean = jnp.mean(iou_loss * mask)
    bce_mean = jnp.sum(bce_p) / float(B * C * P)
    return alpha * bce_mean + (1.0 - alpha) * iou_mean


def _reference_loss(pred, target, *, n_cls, alpha=0.25, eps=1e-7):
    """Pure-JAX reference mirroring the PyTorch module (use_ce=False, log_loss=True)."""
    y = jax.nn.one_hot(target, n_cls, dtype=jnp.float32)           # (B,H,W,C)
    y = jnp.transpose(y, (0, 3, 1, 2))                             # (B,C,H,W)
    x = pred.astype(jnp.float32)
    bce = jnp.mean(jnp.maximum(x, 0.0) - x * y + jnp.log1p(jnp.exp(-jnp.abs(x))))
    b, c, h, w = x.shape
    prob = jax.nn.softmax(x, axis=1).reshape(b, c, -1)
    yv = y.reshape(b, c, -1)
    inter = jnp.sum(prob * yv, axis=(0, 2))
    card = jnp.sum(prob + yv, axis=(0, 2))
    union = card - inter
    jac = inter / jnp.maximum(union, eps)
    iou_loss = -jnp.log(jnp.maximum(jac, eps))
    mask = (jnp.sum(yv, axis=(0, 2)) > 0.0).astype(jnp.float32)
    iou_loss = jnp.mean(iou_loss * mask)
    return alpha * bce + (1.0 - alpha) * iou_loss


if __name__ == "__main__":
    key = jax.random.PRNGKey(0)
    B, n_cls, H, W = 2, 4, 16, 16
    k1, k2 = jax.random.split(key)
    pred = jax.random.normal(k1, (B, n_cls, H, W), dtype=jnp.float32)
    target = jax.random.randint(k2, (B, H, W), 0, n_cls, dtype=jnp.int32)

    loss_fn = jax.jit(functools.partial(iou_bce_loss, n_cls=n_cls))
    loss = jax.block_until_ready(loss_fn(pred, target))

    ref = _reference_loss(pred, target, n_cls=n_cls)
    # 1e-4 tolerance: the kernel softmax uses an approx EUP reciprocal refined
    # by one Newton step (expected error well below 1e-5, headroom left).
    assert jnp.allclose(loss, ref, rtol=1e-4, atol=1e-4), (loss, ref)

    print("KERNEL_OK")
</pallas_src>

<mosaic_0001>
module attributes {stable_mosaic.version = 11 : i64} {
  func.func @_iou_bce_kernel(%arg0: i32, %arg1: i32, %arg2: memref<2x4x8x128xf32, #tpu.memory_space<vmem>>, %arg3: memref<2x8x128xi32, #tpu.memory_space<vmem>>, %arg4: memref<1x4x8x128xf32, #tpu.memory_space<vmem>>, %arg5: memref<1x4x8x128xf32, #tpu.memory_space<vmem>>, %arg6: memref<1x4x8x128xf32, #tpu.memory_space<vmem>>, %arg7: memref<1x4x8x128xf32, #tpu.memory_space<vmem>>) attributes {dimension_semantics = [#tpu.dimension_semantics<parallel>, #tpu.dimension_semantics<arbitrary>], iteration_bounds = array<i64: 1, 1>, scalar_prefetch = 0 : i64, scratch_operands = 0 : i64, tpu.core_type = #tpu.core_type<tc>, window_params = [{transform_indices = @transform_0, window_bounds = array<i64: 2, 4, 8, 128>}, {transform_indices = @transform_1, window_bounds = array<i64: 2, 8, 128>}, {transform_indices = @transform_2, window_bounds = array<i64: 1, 4, 8, 128>}, {transform_indices = @transform_3, window_bounds = array<i64: 1, 4, 8, 128>}, {transform_indices = @transform_4, window_bounds = array<i64: 1, 4, 8, 128>}, {transform_indices = @transform_5, window_bounds = array<i64: 1, 4, 8, 128>}]} {
    %c0_i32 = arith.constant 0 : i32
    %0 = arith.cmpi eq, %arg1, %c0_i32 : i32
    %1 = arith.extui %0 : i1 to i32
    %c0_i32_0 = arith.constant 0 : i32
    %2 = arith.cmpi ne, %1, %c0_i32_0 : i32
    scf.if %2 {
      %cst_70 = arith.constant 0.000000e+00 : f32
      %223 = vector.broadcast %cst_70 : f32 to vector<1x4x8x128xf32>
      %c0_71 = arith.constant 0 : index
      %c0_72 = arith.constant 0 : index
      %c0_73 = arith.constant 0 : index
      %c0_74 = arith.constant 0 : index
      %224 = vector.load %arg4[%c0_71, %c0_72, %c0_73, %c0_74] : memref<1x4x8x128xf32, #tpu.memory_space<vmem>>, vector<1x4x8x128xf32>
      tpu.vector_store %arg4[%c0_71, %c0_72, %c0_73, %c0_74], %223 {strides = array<i32>} : memref<1x4x8x128xf32, #tpu.memory_space<vmem>>, vector<1x4x8x128xf32>,
      %cst_75 = arith.constant 0.000000e+00 : f32
      %225 = vector.broadcast %cst_75 : f32 to vector<1x4x8x128xf32>
      %c0_76 = arith.constant 0 : index
      %c0_77 = arith.constant 0 : index
      %c0_78 = arith.constant 0 : index
      %c0_79 = arith.constant 0 : index
      %226 = vector.load %arg5[%c0_76, %c0_77, %c0_78, %c0_79] : memref<1x4x8x128xf32, #tpu.memory_space<vmem>>, vector<1x4x8x128xf32>
      tpu.vector_store %arg5[%c0_76, %c0_77, %c0_78, %c0_79], %225 {strides = array<i32>} : memref<1x4x8x128xf32, #tpu.memory_space<vmem>>, vector<1x4x8x128xf32>,
      %cst_80 = arith.constant 0.000000e+00 : f32
      %227 = vector.broadcast %cst_80 : f32 to vector<1x4x8x128xf32>
      %c0_81 = arith.constant 0 : index
      %c0_82 = arith.constant 0 : index
      %c0_83 = arith.constant 0 : index
      %c0_84 = arith.constant 0 : index
      %228 = vector.load %arg6[%c0_81, %c0_82, %c0_83, %c0_84] : memref<1x4x8x128xf32, #tpu.memory_space<vmem>>, vector<1x4x8x128xf32>
      tpu.vector_store %arg6[%c0_81, %c0_82, %c0_83, %c0_84], %227 {strides = array<i32>} : memref<1x4x8x128xf32, #tpu.memory_space<vmem>>, vector<1x4x8x128xf32>,
      %cst_85 = arith.constant 0.000000e+00 : f32
      %229 = vector.broadcast %cst_85 : f32 to vector<1x4x8x128xf32>
      %c0_86 = arith.constant 0 : index
      %c0_87 = arith.constant 0 : index
      %c0_88 = arith.constant 0 : index
      %c0_89 = arith.constant 0 : index
      %230 = vector.load %arg7[%c0_86, %c0_87, %c0_88, %c0_89] : memref<1x4x8x128xf32, #tpu.memory_space<vmem>>, vector<1x4x8x128xf32>
      tpu.vector_store %arg7[%c0_86, %c0_87, %c0_88, %c0_89], %229 {strides = array<i32>} : memref<1x4x8x128xf32, #tpu.memory_space<vmem>>, vector<1x4x8x128xf32>,
    } else {
    }
    %c0 = arith.constant 0 : index
    %c0_1 = arith.constant 0 : index
    %c0_2 = arith.constant 0 : index
    %c0_3 = arith.constant 0 : index
    %3 = vector.load %arg2[%c0, %c0_1, %c0_2, %c0_3] : memref<2x4x8x128xf32, #tpu.memory_space<vmem>>, vector<2x4x8x128xf32>
    %c1_i32 = arith.constant 1 : i32
    %4 = arith.muli %arg0, %c1_i32 : i32
    %5 = arith.addi %4, %arg1 : i32
    %c8_i32 = arith.constant 8 : i32
    %6 = arith.muli %5, %c8_i32 : i32
    %7 = tpu.iota {dimensions = array<i32: 0>} : vector<8x128xi32>
    %8 = tpu.iota {dimensions = array<i32: 1>} : vector<8x128xi32>
    %9 = vector.broadcast %6 : i32 to vector<8x128xi32>
    %10 = arith.addi %9, %7 : vector<8x128xi32>
    %c128_i32 = arith.constant 128 : i32
    %11 = vector.broadcast %c128_i32 : i32 to vector<8x128xi32>
    %12 = arith.muli %10, %11 : vector<8x128xi32>
    %13 = arith.addi %12, %8 : vector<8x128xi32>
    %c256_i32 = arith.constant 256 : i32
    %14 = vector.broadcast %c256_i32 : i32 to vector<8x128xi32>
    %15 = arith.cmpi slt, %13, %14 : vector<8x128xi32>
    %16 = arith.extui %15 : vector<8x128xi1> to vector<8x128xi32>
    %17 = arith.sitofp %16 : vector<8x128xi32> to vector<8x128xf32>
    %c0_4 = arith.constant 0 : index
    %c0_5 = arith.constant 0 : index
    %c0_6 = arith.constant 0 : index
    %18 = vector.load %arg3[%c0_4, %c0_5, %c0_6] : memref<2x8x128xi32, #tpu.memory_space<vmem>>, vector<2x8x128xi32>
    %c-1_i32 = arith.constant -1 : i32
    %19 = vector.shape_cast %15 : vector<8x128xi1> to vector<1x8x128xi1>
    %20 = vector.broadcast %19 : vector<1x8x128xi1> to vector<2x8x128xi1>
    %21 = vector.broadcast %c-1_i32 : i32 to vector<2x8x128xi32>
    %22 = arith.select %20, %18, %21 : vector<2x8x128xi1>, vector<2x8x128xi32>
    %23 = vector.extract_strided_slice %3 {offsets = [0, 0, 0, 0], sizes = [2, 1, 8, 128], strides = [1, 1, 1, 1]} : vector<2x4x8x128xf32> to vector<2x1x8x128xf32>
    %24 = vector.shape_cast %23 : vector<2x1x8x128xf32> to vector<2x8x128xf32>
    %25 = vector.extract_strided_slice %3 {offsets = [0, 1, 0, 0], sizes = [2, 1, 8, 128], strides = [1, 1, 1, 1]} : vector<2x4x8x128xf32> to vector<2x1x8x128xf32>
    %26 = vector.shape_cast %25 : vector<2x1x8x128xf32> to vector<2x8x128xf32>
    %27 = arith.maximumf %24, %26 : vector<2x8x128xf32>
    %28 = vector.extract_strided_slice %3 {offsets = [0, 2, 0, 0], sizes = [2, 1, 8, 128], strides = [1, 1, 1, 1]} : vector<2x4x8x128xf32> to vector<2x1x8x128xf32>
    %29 = vector.shape_cast %28 : vector<2x1x8x128xf32> to vector<2x8x128xf32>
    %30 = arith.maximumf %27, %29 : vector<2x8x128xf32>
    %31 = vector.extract_strided_slice %3 {offsets = [0, 3, 0, 0], sizes = [2, 1, 8, 128], strides = [1, 1, 1, 1]} : vector<2x4x8x128xf32> to vector<2x1x8x128xf32>
    %32 = vector.shape_cast %31 : vector<2x1x8x128xf32> to vector<2x8x128xf32>
    %33 = arith.maximumf %30, %32 : vector<2x8x128xf32>
    %cst = arith.constant 0.000000e+00 : f32
    %34 = vector.broadcast %cst : f32 to vector<2x8x128xf32>
    %35 = vector.extract_strided_slice %3 {offsets = [0, 0, 0, 0], sizes = [2, 1, 8, 128], strides = [1, 1, 1, 1]} : vector<2x4x8x128xf32> to vector<2x1x8x128xf32>
    %36 = vector.shape_cast %35 : vector<2x1x8x128xf32> to vector<2x8x128xf32>
    %c0_i32_7 = arith.constant 0 : i32
    %37 = vector.broadcast %c0_i32_7 : i32 to vector<2x8x128xi32>
    %38 = arith.cmpi eq, %22, %37 : vector<2x8x128xi32>
    %39 = arith.extui %38 : vector<2x8x128xi1> to vector<2x8x128xi32>
    %40 = arith.sitofp %39 : vector<2x8x128xi32> to vector<2x8x128xf32>
    %41 = arith.subf %36, %33 : vector<2x8x128xf32>
    %42 = math.exp %41 : vector<2x8x128xf32>
    %43 = arith.addf %34, %42 : vector<2x8x128xf32>
    %cst_8 = arith.constant 0.000000e+00 : f32
    %44 = vector.broadcast %cst_8 : f32 to vector<2x8x128xf32>
    %45 = arith.maximumf %36, %44 : vector<2x8x128xf32>
    %46 = arith.mulf %36, %40 : vector<2x8x128xf32>
    %47 = arith.subf %45, %46 : vector<2x8x128xf32>
    %48 = math.absf %36 : vector<2x8x128xf32>
    %cst_9 = arith.constant 0.000000e+00 : f32
    %49 = vector.broadcast %cst_9 : f32 to vector<2x8x128xf32>
    %50 = arith.subf %49, %48 : vector<2x8x128xf32>
    %51 = math.exp %50 : vector<2x8x128xf32>
    %52 = math.log1p %51 : vector<2x8x128xf32>
    %53 = arith.addf %47, %52 : vector<2x8x128xf32>
    %54 = vector.shape_cast %17 : vector<8x128xf32> to vector<1x8x128xf32>
    %55 = vector.broadcast %54 : vector<1x8x128xf32> to vector<2x8x128xf32>
    %56 = arith.mulf %53, %55 : vector<2x8x128xf32>
    %57 = vector.shape_cast %56 : vector<2x8x128xf32> to vector<2x1x8x128xf32>
    %cst_10 = arith.constant dense<0.000000e+00> : vector<8x128xf32>
    %58 = vector.multi_reduction <add>, %57, %cst_10 [0, 1] : vector<2x1x8x128xf32> to vector<8x128xf32>
    %59 = vector.shape_cast %40 : vector<2x8x128xf32> to vector<2x1x8x128xf32>
    %cst_11 = arith.constant dense<0.000000e+00> : vector<8x128xf32>
    %60 = vector.multi_reduction <add>, %59, %cst_11 [0, 1] : vector<2x1x8x128xf32> to vector<8x128xf32>
    %61 = vector.extract_strided_slice %3 {offsets = [0, 1, 0, 0], sizes = [2, 1, 8, 128], strides = [1, 1, 1, 1]} : vector<2x4x8x128xf32> to vector<2x1x8x128xf32>
    %62 = vector.shape_cast %61 : vector<2x1x8x128xf32> to vector<2x8x128xf32>
    %c1_i32_12 = arith.constant 1 : i32
    %63 = vector.broadcast %c1_i32_12 : i32 to vector<2x8x128xi32>
    %64 = arith.cmpi eq, %22, %63 : vector<2x8x128xi32>
    %65 = arith.extui %64 : vector<2x8x128xi1> to vector<2x8x128xi32>
    %66 = arith.sitofp %65 : vector<2x8x128xi32> to vector<2x8x128xf32>
    %67 = arith.subf %62, %33 : vector<2x8x128xf32>
    %68 = math.exp %67 : vector<2x8x128xf32>
    %69 = arith.addf %43, %68 : vector<2x8x128xf32>
    %cst_13 = arith.constant 0.000000e+00 : f32
    %70 = vector.broadcast %cst_13 : f32 to vector<2x8x128xf32>
    %71 = arith.maximumf %62, %70 : vector<2x8x128xf32>
    %72 = arith.mulf %62, %66 : vector<2x8x128xf32>
    %73 = arith.subf %71, %72 : vector<2x8x128xf32>
    %74 = math.absf %62 : vector<2x8x128xf32>
    %cst_14 = arith.constant 0.000000e+00 : f32
    %75 = vector.broadcast %cst_14 : f32 to vector<2x8x128xf32>
    %76 = arith.subf %75, %74 : vector<2x8x128xf32>
    %77 = math.exp %76 : vector<2x8x128xf32>
    %78 = math.log1p %77 : vector<2x8x128xf32>
    %79 = arith.addf %73, %78 : vector<2x8x128xf32>
    %80 = vector.shape_cast %17 : vector<8x128xf32> to vector<1x8x128xf32>
    %81 = vector.broadcast %80 : vector<1x8x128xf32> to vector<2x8x128xf32>
    %82 = arith.mulf %79, %81 : vector<2x8x128xf32>
    %83 = vector.shape_cast %82 : vector<2x8x128xf32> to vector<2x1x8x128xf32>
    %cst_15 = arith.constant dense<0.000000e+00> : vector<8x128xf32>
    %84 = vector.multi_reduction <add>, %83, %cst_15 [0, 1] : vector<2x1x8x128xf32> to vector<8x128xf32>
    %85 = vector.shape_cast %66 : vector<2x8x128xf32> to vector<2x1x8x128xf32>
    %cst_16 = arith.constant dense<0.000000e+00> : vector<8x128xf32>
    %86 = vector.multi_reduction <add>, %85, %cst_16 [0, 1] : vector<2x1x8x128xf32> to vector<8x128xf32>
    %87 = vector.extract_strided_slice %3 {offsets = [0, 2, 0, 0], sizes = [2, 1, 8, 128], strides = [1, 1, 1, 1]} : vector<2x4x8x128xf32> to vector<2x1x8x128xf32>
    %88 = vector.shape_cast %87 : vector<2x1x8x128xf32> to vector<2x8x128xf32>
    %c2_i32 = arith.constant 2 : i32
    %89 = vector.broadcast %c2_i32 : i32 to vector<2x8x128xi32>
    %90 = arith.cmpi eq, %22, %89 : vector<2x8x128xi32>
    %91 = arith.extui %90 : vector<2x8x128xi1> to vector<2x8x128xi32>
    %92 = arith.sitofp %91 : vector<2x8x128xi32> to vector<2x8x128xf32>
    %93 = arith.subf %88, %33 : vector<2x8x128xf32>
    %94 = math.exp %93 : vector<2x8x128xf32>
    %95 = arith.addf %69, %94 : vector<2x8x128xf32>
    %cst_17 = arith.constant 0.000000e+00 : f32
    %96 = vector.broadcast %cst_17 : f32 to vector<2x8x128xf32>
    %97 = arith.maximumf %88, %96 : vector<2x8x128xf32>
    %98 = arith.mulf %88, %92 : vector<2x8x128xf32>
    %99 = arith.subf %97, %98 : vector<2x8x128xf32>
    %100 = math.absf %88 : vector<2x8x128xf32>
    %cst_18 = arith.constant 0.000000e+00 : f32
    %101 = vector.broadcast %cst_18 : f32 to vector<2x8x128xf32>
    %102 = arith.subf %101, %100 : vector<2x8x128xf32>
    %103 = math.exp %102 : vector<2x8x128xf32>
    %104 = math.log1p %103 : vector<2x8x128xf32>
    %105 = arith.addf %99, %104 : vector<2x8x128xf32>
    %106 = vector.shape_cast %17 : vector<8x128xf32> to vector<1x8x128xf32>
    %107 = vector.broadcast %106 : vector<1x8x128xf32> to vector<2x8x128xf32>
    %108 = arith.mulf %105, %107 : vector<2x8x128xf32>
    %109 = vector.shape_cast %108 : vector<2x8x128xf32> to vector<2x1x8x128xf32>
    %cst_19 = arith.constant dense<0.000000e+00> : vector<8x128xf32>
    %110 = vector.multi_reduction <add>, %109, %cst_19 [0, 1] : vector<2x1x8x128xf32> to vector<8x128xf32>
    %111 = vector.shape_cast %92 : vector<2x8x128xf32> to vector<2x1x8x128xf32>
    %cst_20 = arith.constant dense<0.000000e+00> : vector<8x128xf32>
    %112 = vector.multi_reduction <add>, %111, %cst_20 [0, 1] : vector<2x1x8x128xf32> to vector<8x128xf32>
    %113 = vector.extract_strided_slice %3 {offsets = [0, 3, 0, 0], sizes = [2, 1, 8, 128], strides = [1, 1, 1, 1]} : vector<2x4x8x128xf32> to vector<2x1x8x128xf32>
    %114 = vector.shape_cast %113 : vector<2x1x8x128xf32> to vector<2x8x128xf32>
    %c3_i32 = arith.constant 3 : i32
    %115 = vector.broadcast %c3_i32 : i32 to vector<2x8x128xi32>
    %116 = arith.cmpi eq, %22, %115 : vector<2x8x128xi32>
    %117 = arith.extui %116 : vector<2x8x128xi1> to vector<2x8x128xi32>
    %118 = arith.sitofp %117 : vector<2x8x128xi32> to vector<2x8x128xf32>
    %119 = arith.subf %114, %33 : vector<2x8x128xf32>
    %120 = math.exp %119 : vector<2x8x128xf32>
    %121 = arith.addf %95, %120 : vector<2x8x128xf32>
    %cst_21 = arith.constant 0.000000e+00 : f32
    %122 = vector.broadcast %cst_21 : f32 to vector<2x8x128xf32>
    %123 = arith.maximumf %114, %122 : vector<2x8x128xf32>
    %124 = arith.mulf %114, %118 : vector<2x8x128xf32>
    %125 = arith.subf %123, %124 : vector<2x8x128xf32>
    %126 = math.absf %114 : vector<2x8x128xf32>
    %cst_22 = arith.constant 0.000000e+00 : f32
    %127 = vector.broadcast %cst_22 : f32 to vector<2x8x128xf32>
    %128 = arith.subf %127, %126 : vector<2x8x128xf32>
    %129 = math.exp %128 : vector<2x8x128xf32>
    %130 = math.log1p %129 : vector<2x8x128xf32>
    %131 = arith.addf %125, %130 : vector<2x8x128xf32>
    %132 = vector.shape_cast %17 : vector<8x128xf32> to vector<1x8x128xf32>
    %133 = vector.broadcast %132 : vector<1x8x128xf32> to vector<2x8x128xf32>
    %134 = arith.mulf %131, %133 : vector<2x8x128xf32>
    %135 = vector.shape_cast %134 : vector<2x8x128xf32> to vector<2x1x8x128xf32>
    %cst_23 = arith.constant dense<0.000000e+00> : vector<8x128xf32>
    %136 = vector.multi_reduction <add>, %135, %cst_23 [0, 1] : vector<2x1x8x128xf32> to vector<8x128xf32>
    %137 = vector.shape_cast %118 : vector<2x8x128xf32> to vector<2x1x8x128xf32>
    %cst_24 = arith.constant dense<0.000000e+00> : vector<8x128xf32>
    %138 = vector.multi_reduction <add>, %137, %cst_24 [0, 1] : vector<2x1x8x128xf32> to vector<8x128xf32>
    %139 = tpu.reciprocal %121 {approx = true} : vector<2x8x128xf32> -> vector<2x8x128xf32>
    %140 = arith.mulf %121, %139 : vector<2x8x128xf32>
    %cst_25 = arith.constant 2.000000e+00 : f32
    %141 = vector.broadcast %cst_25 : f32 to vector<2x8x128xf32>
    %142 = arith.subf %141, %140 : vector<2x8x128xf32>
    %143 = arith.mulf %139, %142 : vector<2x8x128xf32>
    %144 = vector.shape_cast %17 : vector<8x128xf32> to vector<1x8x128xf32>
    %145 = vector.broadcast %144 : vector<1x8x128xf32> to vector<2x8x128xf32>
    %146 = arith.mulf %143, %145 : vector<2x8x128xf32>
    %147 = arith.mulf %42, %146 : vector<2x8x128xf32>
    %148 = vector.shape_cast %147 : vector<2x8x128xf32> to vector<2x1x8x128xf32>
    %cst_26 = arith.constant dense<0.000000e+00> : vector<8x128xf32>
    %149 = vector.multi_reduction <add>, %148, %cst_26 [0, 1] : vector<2x1x8x128xf32> to vector<8x128xf32>
    %c0_i32_27 = arith.constant 0 : i32
    %150 = vector.broadcast %c0_i32_27 : i32 to vector<2x8x128xi32>
    %151 = arith.cmpi eq, %22, %150 : vector<2x8x128xi32>
    %152 = arith.extui %151 : vector<2x8x128xi1> to vector<2x8x128xi32>
    %153 = arith.sitofp %152 : vector<2x8x128xi32> to vector<2x8x128xf32>
    %154 = arith.mulf %147, %153 : vector<2x8x128xf32>
    %155 = vector.shape_cast %154 : vector<2x8x128xf32> to vector<2x1x8x128xf32>
    %cst_28 = arith.constant dense<0.000000e+00> : vector<8x128xf32>
    %156 = vector.multi_reduction <add>, %155, %cst_28 [0, 1] : vector<2x1x8x128xf32> to vector<8x128xf32>
    %157 = arith.mulf %68, %146 : vector<2x8x128xf32>
    %158 = vector.shape_cast %157 : vector<2x8x128xf32> to vector<2x1x8x128xf32>
    %cst_29 = arith.constant dense<0.000000e+00> : vector<8x128xf32>
    %159 = vector.multi_reduction <add>, %158, %cst_29 [0, 1] : vector<2x1x8x128xf32> to vector<8x128xf32>
    %c1_i32_30 = arith.constant 1 : i32
    %160 = vector.broadcast %c1_i32_30 : i32 to vector<2x8x128xi32>
    %161 = arith.cmpi eq, %22, %160 : vector<2x8x128xi32>
    %162 = arith.extui %161 : vector<2x8x128xi1> to vector<2x8x128xi32>
    %163 = arith.sitofp %162 : vector<2x8x128xi32> to vector<2x8x128xf32>
    %164 = arith.mulf %157, %163 : vector<2x8x128xf32>
    %165 = vector.shape_cast %164 : vector<2x8x128xf32> to vector<2x1x8x128xf32>
    %cst_31 = arith.constant dense<0.000000e+00> : vector<8x128xf32>
    %166 = vector.multi_reduction <add>, %165, %cst_31 [0, 1] : vector<2x1x8x128xf32> to vector<8x128xf32>
    %167 = arith.mulf %94, %146 : vector<2x8x128xf32>
    %168 = vector.shape_cast %167 : vector<2x8x128xf32> to vector<2x1x8x128xf32>
    %cst_32 = arith.constant dense<0.000000e+00> : vector<8x128xf32>
    %169 = vector.multi_reduction <add>, %168, %cst_32 [0, 1] : vector<2x1x8x128xf32> to vector<8x128xf32>
    %c2_i32_33 = arith.constant 2 : i32
    %170 = vector.broadcast %c2_i32_33 : i32 to vector<2x8x128xi32>
    %171 = arith.cmpi eq, %22, %170 : vector<2x8x128xi32>
    %172 = arith.extui %171 : vector<2x8x128xi1> to vector<2x8x128xi32>
    %173 = arith.sitofp %172 : vector<2x8x128xi32> to vector<2x8x128xf32>
    %174 = arith.mulf %167, %173 : vector<2x8x128xf32>
    %175 = vector.shape_cast %174 : vector<2x8x128xf32> to vector<2x1x8x128xf32>
    %cst_34 = arith.constant dense<0.000000e+00> : vector<8x128xf32>
    %176 = vector.multi_reduction <add>, %175, %cst_34 [0, 1] : vector<2x1x8x128xf32> to vector<8x128xf32>
    %177 = arith.mulf %120, %146 : vector<2x8x128xf32>
    %178 = vector.shape_cast %177 : vector<2x8x128xf32> to vector<2x1x8x128xf32>
    %cst_35 = arith.constant dense<0.000000e+00> : vector<8x128xf32>
    %179 = vector.multi_reduction <add>, %178, %cst_35 [0, 1] : vector<2x1x8x128xf32> to vector<8x128xf32>
    %c3_i32_36 = arith.constant 3 : i32
    %180 = vector.broadcast %c3_i32_36 : i32 to vector<2x8x128xi32>
    %181 = arith.cmpi eq, %22, %180 : vector<2x8x128xi32>
    %182 = arith.extui %181 : vector<2x8x128xi1> to vector<2x8x128xi32>
    %183 = arith.sitofp %182 : vector<2x8x128xi32> to vector<2x8x128xf32>
    %184 = arith.mulf %177, %183 : vector<2x8x128xf32>
    %185 = vector.shape_cast %184 : vector<2x8x128xf32> to vector<2x1x8x128xf32>
    %cst_37 = arith.constant dense<0.000000e+00> : vector<8x128xf32>
    %186 = vector.multi_reduction <add>, %185, %cst_37 [0, 1] : vector<2x1x8x128xf32> to vector<8x128xf32>
    %c0_38 = arith.constant 0 : index
    %c0_39 = arith.constant 0 : index
    %c0_40 = arith.constant 0 : index
    %c0_41 = arith.constant 0 : index
    %187 = vector.load %arg4[%c0_38, %c0_39, %c0_40, %c0_41] : memref<1x4x8x128xf32, #tpu.memory_space<vmem>>, vector<1x4x8x128xf32>
    %188 = vector.shape_cast %156 : vector<8x128xf32> to vector<1x8x128xf32>
    %189 = vector.shape_cast %166 : vector<8x128xf32> to vector<1x8x128xf32>
    %190 = vector.shape_cast %176 : vector<8x128xf32> to vector<1x8x128xf32>
    %191 = vector.shape_cast %186 : vector<8x128xf32> to vector<1x8x128xf32>
    %192 = tpu.concatenate %188, %189, %190, %191 in 0 : vector<1x8x128xf32>, vector<1x8x128xf32>, vector<1x8x128xf32>, vector<1x8x128xf32> -> vector<4x8x128xf32>
    %193 = vector.shape_cast %192 : vector<4x8x128xf32> to vector<1x4x8x128xf32>
    %194 = arith.addf %187, %193 : vector<1x4x8x128xf32>
    %c0_42 = arith.constant 0 : index
    %c0_43 = arith.constant 0 : index
    %c0_44 = arith.constant 0 : index
    %c0_45 = arith.constant 0 : index
    %195 = vector.load %arg4[%c0_42, %c0_43, %c0_44, %c0_45] : memref<1x4x8x128xf32, #tpu.memory_space<vmem>>, vector<1x4x8x128xf32>
    tpu.vector_store %arg4[%c0_42, %c0_43, %c0_44, %c0_45], %194 {strides = array<i32>} : memref<1x4x8x128xf32, #tpu.memory_space<vmem>>, vector<1x4x8x128xf32>,
    %c0_46 = arith.constant 0 : index
    %c0_47 = arith.constant 0 : index
    %c0_48 = arith.constant 0 : index
    %c0_49 = arith.constant 0 : index
    %196 = vector.load %arg5[%c0_46, %c0_47, %c0_48, %c0_49] : memref<1x4x8x128xf32, #tpu.memory_space<vmem>>, vector<1x4x8x128xf32>
    %197 = vector.shape_cast %149 : vector<8x128xf32> to vector<1x8x128xf32>
    %198 = vector.shape_cast %159 : vector<8x128xf32> to vector<1x8x128xf32>
    %199 = vector.shape_cast %169 : vector<8x128xf32> to vector<1x8x128xf32>
    %200 = vector.shape_cast %179 : vector<8x128xf32> to vector<1x8x128xf32>
    %201 = tpu.concatenate %197, %198, %199, %200 in 0 : vector<1x8x128xf32>, vector<1x8x128xf32>, vector<1x8x128xf32>, vector<1x8x128xf32> -> vector<4x8x128xf32>
    %202 = vector.shape_cast %201 : vector<4x8x128xf32> to vector<1x4x8x128xf32>
    %203 = arith.addf %196, %202 : vector<1x4x8x128xf32>
    %c0_50 = arith.constant 0 : index
    %c0_51 = arith.constant 0 : index
    %c0_52 = arith.constant 0 : index
    %c0_53 = arith.constant 0 : index
    %204 = vector.load %arg5[%c0_50, %c0_51, %c0_52, %c0_53] : memref<1x4x8x128xf32, #tpu.memory_space<vmem>>, vector<1x4x8x128xf32>
    tpu.vector_store %arg5[%c0_50, %c0_51, %c0_52, %c0_53], %203 {strides = array<i32>} : memref<1x4x8x128xf32, #tpu.memory_space<vmem>>, vector<1x4x8x128xf32>,
    %c0_54 = arith.constant 0 : index
    %c0_55 = arith.constant 0 : index
    %c0_56 = arith.constant 0 : index
    %c0_57 = arith.constant 0 : index
    %205 = vector.load %arg6[%c0_54, %c0_55, %c0_56, %c0_57] : memref<1x4x8x128xf32, #tpu.memory_space<vmem>>, vector<1x4x8x128xf32>
    %206 = vector.shape_cast %60 : vector<8x128xf32> to vector<1x8x128xf32>
    %207 = vector.shape_cast %86 : vector<8x128xf32> to vector<1x8x128xf32>
    %208 = vector.shape_cast %112 : vector<8x128xf32> to vector<1x8x128xf32>
    %209 = vector.shape_cast %138 : vector<8x128xf32> to vector<1x8x128xf32>
    %210 = tpu.concatenate %206, %207, %208, %209 in 0 : vector<1x8x128xf32>, vector<1x8x128xf32>, vector<1x8x128xf32>, vector<1x8x128xf32> -> vector<4x8x128xf32>
    %211 = vector.shape_cast %210 : vector<4x8x128xf32> to vector<1x4x8x128xf32>
    %212 = arith.addf %205, %211 : vector<1x4x8x128xf32>
    %c0_58 = arith.constant 0 : index
    %c0_59 = arith.constant 0 : index
    %c0_60 = arith.constant 0 : index
    %c0_61 = arith.constant 0 : index
    %213 = vector.load %arg6[%c0_58, %c0_59, %c0_60, %c0_61] : memref<1x4x8x128xf32, #tpu.memory_space<vmem>>, vector<1x4x8x128xf32>
    tpu.vector_store %arg6[%c0_58, %c0_59, %c0_60, %c0_61], %212 {strides = array<i32>} : memref<1x4x8x128xf32, #tpu.memory_space<vmem>>, vector<1x4x8x128xf32>,
    %c0_62 = arith.constant 0 : index
    %c0_63 = arith.constant 0 : index
    %c0_64 = arith.constant 0 : index
    %c0_65 = arith.constant 0 : index
    %214 = vector.load %arg7[%c0_62, %c0_63, %c0_64, %c0_65] : memref<1x4x8x128xf32, #tpu.memory_space<vmem>>, vector<1x4x8x128xf32>
    %215 = vector.shape_cast %58 : vector<8x128xf32> to vector<1x8x128xf32>
    %216 = vector.shape_cast %84 : vector<8x128xf32> to vector<1x8x128xf32>
    %217 = vector.shape_cast %110 : vector<8x128xf32> to vector<1x8x128xf32>
    %218 = vector.shape_cast %136 : vector<8x128xf32> to vector<1x8x128xf32>
    %219 = tpu.concatenate %215, %216, %217, %218 in 0 : vector<1x8x128xf32>, vector<1x8x128xf32>, vector<1x8x128xf32>, vector<1x8x128xf32> -> vector<4x8x128xf32>
    %220 = vector.shape_cast %219 : vector<4x8x128xf32> to vector<1x4x8x128xf32>
    %221 = arith.addf %214, %220 : vector<1x4x8x128xf32>
    %c0_66 = arith.constant 0 : index
    %c0_67 = arith.constant 0 : index
    %c0_68 = arith.constant 0 : index
    %c0_69 = arith.constant 0 : index
    %222 = vector.load %arg7[%c0_66, %c0_67, %c0_68, %c0_69] : memref<1x4x8x128xf32, #tpu.memory_space<vmem>>, vector<1x4x8x128xf32>
    tpu.vector_store %arg7[%c0_66, %c0_67, %c0_68, %c0_69], %221 {strides = array<i32>} : memref<1x4x8x128xf32, #tpu.memory_space<vmem>>, vector<1x4x8x128xf32>,
    return
  }
  func.func @transform_0(%arg0: i32, %arg1: i32) -> (i32, i32, i32, i32) {
    %c1_i32 = arith.constant 1 : i32
    %0 = arith.muli %arg0, %c1_i32 : i32
    %1 = arith.addi %0, %arg1 : i32
    %c0_i32 = arith.constant 0 : i32
    %c0_i32_0 = arith.constant 0 : i32
    %c0_i32_1 = arith.constant 0 : i32
    %c0_i32_2 = arith.constant 0 : i32
    return %c0_i32, %c0_i32_0, %1, %c0_i32_1 : i32, i32, i32, i32
  }
  func.func @transform_1(%arg0: i32, %arg1: i32) -> (i32, i32, i32) {
    %c1_i32 = arith.constant 1 : i32
    %0 = arith.muli %arg0, %c1_i32 : i32
    %1 = arith.addi %0, %arg1 : i32
    %c0_i32 = arith.constant 0 : i32
    %c0_i32_0 = arith.constant 0 : i32
    %c0_i32_1 = arith.constant 0 : i32
    return %c0_i32, %1, %c0_i32_0 : i32, i32, i32
  }
  func.func @transform_2(%arg0: i32, %arg1: i32) -> (i32, i32, i32, i32) {
    %c0_i32 = arith.constant 0 : i32
    %c0_i32_0 = arith.constant 0 : i32
    %c0_i32_1 = arith.constant 0 : i32
    %c0_i32_2 = arith.constant 0 : i32
    return %arg0, %c0_i32, %c0_i32_0, %c0_i32_1 : i32, i32, i32, i32
  }
  func.func @transform_3(%arg0: i32, %arg1: i32) -> (i32, i32, i32, i32) {
    %c0_i32 = arith.constant 0 : i32
    %c0_i32_0 = arith.constant 0 : i32
    %c0_i32_1 = arith.constant 0 : i32
    %c0_i32_2 = arith.constant 0 : i32
    return %arg0, %c0_i32, %c0_i32_0, %c0_i32_1 : i32, i32, i32, i32
  }
  func.func @transform_4(%arg0: i32, %arg1: i32) -> (i32, i32, i32, i32) {
    %c0_i32 = arith.constant 0 : i32
    %c0_i32_0 = arith.constant 0 : i32
    %c0_i32_1 = arith.constant 0 : i32
    %c0_i32_2 = arith.constant 0 : i32
    return %arg0, %c0_i32, %c0_i32_0, %c0_i32_1 : i32, i32, i32, i32
  }
  func.func @transform_5(%arg0: i32, %arg1: i32) -> (i32, i32, i32, i32) {
    %c0_i32 = arith.constant 0 : i32
    %c0_i32_0 = arith.constant 0 : i32
    %c0_i32_1 = arith.constant 0 : i32
    %c0_i32_2 = arith.constant 0 : i32
    return %arg0, %c0_i32, %c0_i32_0, %c0_i32_1 : i32, i32, i32, i32
  }
}

</mosaic_0001>

<llo_original>
// kernel: iou_bce_loss.1
$region0: #{iou_bce_loss.1}
  #allocation0 [shape = 'u32[]', space=smem, size = 0x4, offset = 0x4, fixed_abs, tag = 'smem constant byte address 0x4 - core index']
  #allocation1 [shape = 'u32[72,128]{1,0:T(1,128)}', space=vmem, size = 0x9000, scoped, tag = 'internal scratch']
  %s0 = inlined_call_operand.vmem [shape: f32[2,4,8,128], index: 0, kind: input, shape index: {}]
  %s1 = inlined_call_operand.vmem [shape: s32[2,8,128], index: 1, kind: input, shape index: {}]
  %s2 = inlined_call_operand.vmem [shape: f32[1,4,8,128], index: 2, kind: output, shape index: {0}]
  %s3 = inlined_call_operand.vmem [shape: f32[1,4,8,128], index: 3, kind: output, shape index: {1}]
  %s4 = inlined_call_operand.vmem [shape: f32[1,4,8,128], index: 4, kind: output, shape index: {2}]
  %s5 = inlined_call_operand.vmem [shape: f32[1,4,8,128], index: 5, kind: output, shape index: {3}]
  %6 = xla_tuple %s2, %s3, %s4, %s5
  %s7 = sld [smem:[#allocation0]]
  $region46: #{iou_bce_loss.1} parent=0
    _
  %s9 = ssub.s32 1, %s7
  %s10 = scalar_select 0, %s9, %s7
  // Predicated region
  $region2: #{iou_bce_loss.1} parent=0 // pred_check
    _
  $region3: #{iou_bce_loss.1} parent=0 // pred_check_branch
    %12 = sbr.rel (0) target = $region5
  $region4: #{iou_bce_loss.1} parent=0 // pred_region
    %s13 = sadd.s32 0, 0
    %p14 = scmp.lt.s32.totalorder %s13, 0
    %s15 = scalar_select %p14, %s13, 0
    %s16 = smul.addr %s15, 8
    %s17 = scalar_lea.vmem %s0, %s16
    %s18 = sadd.s32 0, 0
  $region5: #{iou_bce_loss.1} parent=0 // pred_fallthru
    _
  // Predicated region
  $region6: #{iou_bce_loss.1} parent=0 // pred_check
    _
  $region7: #{iou_bce_loss.1} parent=0 // pred_check_branch
    %20 = sbr.rel (0) target = $region9
  $region8: #{iou_bce_loss.1} parent=0 // pred_region
    %s21 = sadd.s32 0, 0
    %p22 = scmp.lt.s32.totalorder %s21, 0
    %s23 = scalar_select %p22, %s21, 0
    %s24 = smul.addr %s23, 8
    %s25 = scalar_lea.vmem %s1, %s24
    %s26 = sadd.s32 0, 0
  $region9: #{iou_bce_loss.1} parent=0 // pred_fallthru
    _
  %s27 = sadd.s32 0, 0
  %p28 = scmp.lt.s32.totalorder %s27, 0
  %s29 = scalar_select %p28, %s27, 0
  %s30 = smul.addr %s29, 8
  %s31 = scalar_lea.vmem %s0, %s30
  %s32 = sadd.s32 0, 0
  %p33 = scmp.lt.s32.totalorder %s32, 0
  %s34 = scalar_select %p33, %s32, 0
  %s35 = smul.addr %s34, 8
  %s36 = scalar_lea.vmem %s1, %s35
  %s37 = sadd.s32 0, 0
  %p38 = scmp.lt.s32.totalorder %s37, 0
  %s39 = scalar_select %p38, %s37, 0
  %s40 = smul.addr %s39, 8
  %s41 = scalar_lea.vmem %s0, %s40
  %s42 = sadd.s32 0, 0
  %s43 = sadd.s32 0, 0
  %p44 = scmp.lt.s32.totalorder %s43, 0
  %s45 = scalar_select %p44, %s43, 0
  %s46 = smul.addr %s45, 8
  %s47 = scalar_lea.vmem %s1, %s46
  %s48 = sadd.s32 0, 0
  %p49 = scmp.eq.s32.totalorder 0, 0
  // Predicated region
  $region10: #{iou_bce_loss.1} parent=0 // pred_check
    %p50 = pneg %p49
  $region11: #{iou_bce_loss.1} parent=0 // pred_check_branch
    %52 = sbr.rel (%p50) target = $region13
  $region12: #{iou_bce_loss.1} parent=0 // pred_region
    %53 = vst [vmem:[%s2] sm:$0xff] 0.0
    %54 = vst [vmem:[%s2 + $0x8] sm:$0xff] 0.0
    %55 = vst [vmem:[%s2 + $0x10] sm:$0xff] 0.0
    %56 = vst [vmem:[%s2 + $0x18] sm:$0xff] 0.0
    %57 = vst [vmem:[%s3] sm:$0xff] 0.0
    %58 = vst [vmem:[%s3 + $0x8] sm:$0xff] 0.0
    %59 = vst [vmem:[%s3 + $0x10] sm:$0xff] 0.0
    %60 = vst [vmem:[%s3 + $0x18] sm:$0xff] 0.0
    %61 = vst [vmem:[%s4] sm:$0xff] 0.0
    %62 = vst [vmem:[%s4 + $0x8] sm:$0xff] 0.0
    %63 = vst [vmem:[%s4 + $0x10] sm:$0xff] 0.0
    %64 = vst [vmem:[%s4 + $0x18] sm:$0xff] 0.0
    %65 = vst [vmem:[%s5] sm:$0xff] 0.0
    %66 = vst [vmem:[%s5 + $0x8] sm:$0xff] 0.0
    %67 = vst [vmem:[%s5 + $0x10] sm:$0xff] 0.0
    %68 = vst [vmem:[%s5 + $0x18] sm:$0xff] 0.0
  $region13: #{iou_bce_loss.1} parent=0 // pred_fallthru
    _
  %v69 = vld [vmem:[%s41] sm:$0xff]
  %v70 = vld [vmem:[%s41 + $0x8] sm:$0xff]
  %v71 = vld [vmem:[%s41 + $0x10] sm:$0xff]
  %v72 = vld [vmem:[%s41 + $0x18] sm:$0xff]
  %v73 = vld [vmem:[%s41 + $0x20] sm:$0xff]
  %v74 = vld [vmem:[%s41 + $0x28] sm:$0xff]
  %v75 = vld [vmem:[%s41 + $0x30] sm:$0xff]
  %v76 = vld [vmem:[%s41 + $0x38] sm:$0xff]
  %s77 = sadd.s32 0, 0
  %s78 = smul.u32 %s77, 8
  %v79 = vlaneseq
  %v80 = vshrl.u32 %v79, 7
  %v81 = vlaneseq
  %v82 = vand.u32 %v81, 127
  %v83 = vstv %s78
  %v84 = vadd.s32 %v83, %v80
  %v85 = vmul.u32 %v84, 128
  %v86 = vadd.s32 %v85, %v82
  %vm87 = vcmp.lt.s32.totalorder %v86, 256
  %v88 = vsel %vm87, 1, 0
  %v89 = vcvt.s32.f32 %v88
  %v90 = vld [vmem:[%s47] sm:$0xff]
  %v91 = vld [vmem:[%s47 + $0x8] sm:$0xff]
  %vm92 = vcmp.eq.s32.totalorder %v88, 1
  %v93 = vsel %vm92, %v90, 4294967295
  %v94 = vsel %vm92, %v91, 4294967295
  %v95 = vmax.f32 %v69, %v70
  %v96 = vmax.f32 %v73, %v74
  %v97 = vmax.f32 %v95, %v71
  %v98 = vmax.f32 %v96, %v75
  %v99 = vmax.f32 %v97, %v72
  %v100 = vmax.f32 %v98, %v76
  %vm101 = vcmp.eq.s32.totalorder %v93, 0
  %vm102 = vcmp.eq.s32.totalorder %v94, 0
  %v103 = vsel %vm101, 1, 0
  %v104 = vsel %vm102, 1, 0
  %v105 = vcvt.s32.f32 %v103
  %v106 = vcvt.s32.f32 %v104
  %v107 = vsub.f32 %v69, %v99
  %v108 = vsub.f32 %v73, %v100
  %v109 = vmul.f32 %v107, 1.442695
  %v110 = vpow.pop %v109
  %v111 = vmul.f32 %v108, 1.442695
  %v112 = vpow.pop %v111
  %v113 = vadd.f32 %v110, 0.0
  %v114 = vadd.f32 %v112, 0.0
  %v115 = vmax.f32 %v69, 0.0
  %v116 = vmax.f32 %v73, 0.0
  %v117 = vmul.f32 %v69, %v105
  %v118 = vmul.f32 %v73, %v106
  %v119 = vsub.f32 %v115, %v117
  %v120 = vsub.f32 %v116, %v118
  %v121 = vand.u32 2147483647, %v69
  %v122 = vand.u32 2147483647, %v73
  %v123 = vsub.f32 0.0, %v121
  %v124 = vsub.f32 0.0, %v122
  %v125 = vmul.f32 %v123, 1.442695
  %v126 = vpow.pop %v125
  %v127 = vmul.f32 %v124, 1.442695
  %v128 = vpow.pop %v127
  %v129 = vadd.f32 %v126, 1.0
  %v130 = vlog2.pop %v129
  %v131 = vmul.f32 %v130, 0.6931472
  %v132 = vmul.f32 -0.5, %v126
  %v133 = vadd.f32 %v132, 1.0
  %v134 = vmul.f32 %v133, %v126
  %v135 = vand.u32 2147483647, %v126
  %vm136 = vcmp.lt.f32.partialorder %v135, 0.0004427343
  %v137 = vsel %vm136, %v134, %v131
  %v138 = vadd.f32 %v128, 1.0
  %v139 = vlog2.pop %v138
  %v140 = vmul.f32 %v139, 0.6931472
  %v141 = vmul.f32 -0.5, %v128
  %v142 = vadd.f32 %v141, 1.0
  %v143 = vmul.f32 %v142, %v128
  %v144 = vand.u32 2147483647, %v128
  %vm145 = vcmp.lt.f32.partialorder %v144, 0.0004427343
  %v146 = vsel %vm145, %v143, %v140
  %v147 = vadd.f32 %v119, %v137
  %v148 = vadd.f32 %v120, %v146
  %v149 = vmul.f32 %v147, %v89
  %v150 = vmul.f32 %v148, %v89
  %v151 = vadd.f32 %v149, %v150
  %v152 = vadd.f32 %v105, %v106
  %vm153 = vcmp.eq.s32.totalorder %v93, 1
  %vm154 = vcmp.eq.s32.totalorder %v94, 1
  %v155 = vsel %vm153, 1, 0
  %v156 = vsel %vm154, 1, 0
  %v157 = vcvt.s32.f32 %v155
  %v158 = vcvt.s32.f32 %v156
  %v159 = vsub.f32 %v70, %v99
  %v160 = vsub.f32 %v74, %v100
  %v161 = vmul.f32 %v159, 1.442695
  %v162 = vpow.pop %v161
  %v163 = vmul.f32 %v160, 1.442695
  %v164 = vpow.pop %v163
  %v165 = vadd.f32 %v113, %v162
  %v166 = vadd.f32 %v114, %v164
  %v167 = vmax.f32 %v70, 0.0
  %v168 = vmax.f32 %v74, 0.0
  %v169 = vmul.f32 %v70, %v157
  %v170 = vmul.f32 %v74, %v158
  %v171 = vsub.f32 %v167, %v169
  %v172 = vsub.f32 %v168, %v170
  %v173 = vand.u32 2147483647, %v70
  %v174 = vand.u32 2147483647, %v74
  %v175 = vsub.f32 0.0, %v173
  %v176 = vsub.f32 0.0, %v174
  %v177 = vmul.f32 %v175, 1.442695
  %v178 = vpow.pop %v177
  %v179 = vmul.f32 %v176, 1.442695
  %v180 = vpow.pop %v179
  %v181 = vadd.f32 %v178, 1.0
  %v182 = vlog2.pop %v181
  %v183 = vmul.f32 %v182, 0.6931472
  %v184 = vmul.f32 -0.5, %v178
  %v185 = vadd.f32 %v184, 1.0
  %v186 = vmul.f32 %v185, %v178
  %v187 = vand.u32 2147483647, %v178
  %vm188 = vcmp.lt.f32.partialorder %v187, 0.0004427343
  %v189 = vsel %vm188, %v186, %v183
  %v190 = vadd.f32 %v180, 1.0
  %v191 = vlog2.pop %v190
  %v192 = vmul.f32 %v191, 0.6931472
  %v193 = vmul.f32 -0.5, %v180
  %v194 = vadd.f32 %v193, 1.0
  %v195 = vmul.f32 %v194, %v180
  %v196 = vand.u32 2147483647, %v180
  %vm197 = vcmp.lt.f32.partialorder %v196, 0.0004427343
  %v198 = vsel %vm197, %v195, %v192
  %v199 = vadd.f32 %v171, %v189
  %v200 = vadd.f32 %v172, %v198
  %v201 = vmul.f32 %v199, %v89
  %v202 = vmul.f32 %v200, %v89
  %v203 = vadd.f32 %v201, %v202
  %v204 = vadd.f32 %v157, %v158
  %vm205 = vcmp.eq.s32.totalorder %v93, 2
  %vm206 = vcmp.eq.s32.totalorder %v94, 2
  %v207 = vsel %vm205, 1, 0
  %v208 = vsel %vm206, 1, 0
  %v209 = vcvt.s32.f32 %v207
  %v210 = vcvt.s32.f32 %v208
  %v211 = vsub.f32 %v71, %v99
  %v212 = vsub.f32 %v75, %v100
  %v213 = vmul.f32 %v211, 1.442695
  %v214 = vpow.pop %v213
  %v215 = vmul.f32 %v212, 1.442695
  %v216 = vpow.pop %v215
  %v217 = vadd.f32 %v165, %v214
  %v218 = vadd.f32 %v166, %v216
  %v219 = vmax.f32 %v71, 0.0
  %v220 = vmax.f32 %v75, 0.0
  %v221 = vmul.f32 %v71, %v209
  %v222 = vmul.f32 %v75, %v210
  %v223 = vsub.f32 %v219, %v221
  %v224 = vsub.f32 %v220, %v222
  %v225 = vand.u32 2147483647, %v71
  %v226 = vand.u32 2147483647, %v75
  %v227 = vsub.f32 0.0, %v225
  %v228 = vsub.f32 0.0, %v226
  %v229 = vmul.f32 %v227, 1.442695
  %v230 = vpow.pop %v229
  %v231 = vmul.f32 %v228, 1.442695
  %v232 = vpow.pop %v231
  %v233 = vadd.f32 %v230, 1.0
  %v234 = vlog2.pop %v233
  %v235 = vmul.f32 %v234, 0.6931472
  %v236 = vmul.f32 -0.5, %v230
  %v237 = vadd.f32 %v236, 1.0
  %v238 = vmul.f32 %v237, %v230
  %v239 = vand.u32 2147483647, %v230
  %vm240 = vcmp.lt.f32.partialorder %v239, 0.0004427343
  %v241 = vsel %vm240, %v238, %v235
  %v242 = vadd.f32 %v232, 1.0
  %v243 = vlog2.pop %v242
  %v244 = vmul.f32 %v243, 0.6931472
  %v245 = vmul.f32 -0.5, %v232
  %v246 = vadd.f32 %v245, 1.0
  %v247 = vmul.f32 %v246, %v232
  %v248 = vand.u32 2147483647, %v232
  %vm249 = vcmp.lt.f32.partialorder %v248, 0.0004427343
  %v250 = vsel %vm249, %v247, %v244
  %v251 = vadd.f32 %v223, %v241
  %v252 = vadd.f32 %v224, %v250
  %v253 = vmul.f32 %v251, %v89
  %v254 = vmul.f32 %v252, %v89
  %v255 = vadd.f32 %v253, %v254
  %v256 = vadd.f32 %v209, %v210
  %vm257 = vcmp.eq.s32.totalorder %v93, 3
  %vm258 = vcmp.eq.s32.totalorder %v94, 3
  %v259 = vsel %vm257, 1, 0
  %v260 = vsel %vm258, 1, 0
  %v261 = vcvt.s32.f32 %v259
  %v262 = vcvt.s32.f32 %v260
  %v263 = vsub.f32 %v72, %v99
  %v264 = vsub.f32 %v76, %v100
  %v265 = vmul.f32 %v263, 1.442695
  %v266 = vpow.pop %v265
  %v267 = vmul.f32 %v264, 1.442695
  %v268 = vpow.pop %v267
  %v269 = vadd.f32 %v217, %v266
  %v270 = vadd.f32 %v218, %v268
  %v271 = vmax.f32 %v72, 0.0
  %v272 = vmax.f32 %v76, 0.0
  %v273 = vmul.f32 %v72, %v261
  %v274 = vmul.f32 %v76, %v262
  %v275 = vsub.f32 %v271, %v273
  %v276 = vsub.f32 %v272, %v274
  %v277 = vand.u32 2147483647, %v72
  %v278 = vand.u32 2147483647, %v76
  %v279 = vsub.f32 0.0, %v277
  %v280 = vsub.f32 0.0, %v278
  %v281 = vmul.f32 %v279, 1.442695
  %v282 = vpow.pop %v281
  %v283 = vmul.f32 %v280, 1.442695
  %v284 = vpow.pop %v283
  %v285 = vadd.f32 %v282, 1.0
  %v286 = vlog2.pop %v285
  %v287 = vmul.f32 %v286, 0.6931472
  %v288 = vmul.f32 -0.5, %v282
  %v289 = vadd.f32 %v288, 1.0
  %v290 = vmul.f32 %v289, %v282
  %v291 = vand.u32 2147483647, %v282
  %vm292 = vcmp.lt.f32.partialorder %v291, 0.0004427343
  %v293 = vsel %vm292, %v290, %v287
  %v294 = vadd.f32 %v284, 1.0
  %v295 = vlog2.pop %v294
  %v296 = vmul.f32 %v295, 0.6931472
  %v297 = vmul.f32 -0.5, %v284
  %v298 = vadd.f32 %v297, 1.0
  %v299 = vmul.f32 %v298, %v284
  %v300 = vand.u32 2147483647, %v284
  %vm301 = vcmp.lt.f32.partialorder %v300, 0.0004427343
  %v302 = vsel %vm301, %v299, %v296
  %v303 = vadd.f32 %v275, %v293
  %v304 = vadd.f32 %v276, %v302
  %v305 = vmul.f32 %v303, %v89
  %v306 = vmul.f32 %v304, %v89
  %v307 = vadd.f32 %v305, %v306
  %v308 = vadd.f32 %v261, %v262
  %v309 = vrcp.pop %v269
  %v310 = vrcp.pop %v270
  %v311 = vmul.f32 %v269, %v309
  %v312 = vmul.f32 %v270, %v310
  %v313 = vsub.f32 2.0, %v311
  %v314 = vsub.f32 2.0, %v312
  %v315 = vmul.f32 %v309, %v313
  %v316 = vmul.f32 %v310, %v314
  %v317 = vmul.f32 %v315, %v89
  %v318 = vmul.f32 %v316, %v89
  %v319 = vmul.f32 %v110, %v317
  %v320 = vmul.f32 %v112, %v318
  %v321 = vadd.f32 %v319, %v320
  %v322 = vmul.f32 %v319, %v105
  %v323 = vmul.f32 %v320, %v106
  %v324 = vadd.f32 %v322, %v323
  %v325 = vmul.f32 %v162, %v317
  %v326 = vmul.f32 %v164, %v318
  %v327 = vadd.f32 %v325, %v326
  %v328 = vmul.f32 %v325, %v157
  %v329 = vmul.f32 %v326, %v158
  %v330 = vadd.f32 %v328, %v329
  %v331 = vmul.f32 %v214, %v317
  %v332 = vmul.f32 %v216, %v318
  %v333 = vadd.f32 %v331, %v332
  %v334 = vmul.f32 %v331, %v209
  %v335 = vmul.f32 %v332, %v210
  %v336 = vadd.f32 %v334, %v335
  %v337 = vmul.f32 %v266, %v317
  %v338 = vmul.f32 %v268, %v318
  %v339 = vadd.f32 %v337, %v338
  %v340 = vmul.f32 %v337, %v261
  %v341 = vmul.f32 %v338, %v262
  %v342 = vadd.f32 %v340, %v341
  %v343 = vld [vmem:[%s2] sm:$0xff]
  %v344 = vld [vmem:[%s2 + $0x8] sm:$0xff]
  %v345 = vld [vmem:[%s2 + $0x10] sm:$0xff]
  %v346 = vld [vmem:[%s2 + $0x18] sm:$0xff]
  %v347 = vadd.f32 %v343, %v324
  %v348 = vadd.f32 %v344, %v330
  %v349 = vadd.f32 %v345, %v336
  %v350 = vadd.f32 %v346, %v342
  %351 = vst [vmem:[%s2] sm:$0xff] %v347
  %352 = vst [vmem:[%s2 + $0x8] sm:$0xff] %v348
  %353 = vst [vmem:[%s2 + $0x10] sm:$0xff] %v349
  %354 = vst [vmem:[%s2 + $0x18] sm:$0xff] %v350
  %v355 = vld [vmem:[%s3] sm:$0xff]
  %v356 = vld [vmem:[%s3 + $0x8] sm:$0xff]
  %v357 = vld [vmem:[%s3 + $0x10] sm:$0xff]
  %v358 = vld [vmem:[%s3 + $0x18] sm:$0xff]
  %v359 = vadd.f32 %v355, %v321
  %v360 = vadd.f32 %v356, %v327
  %v361 = vadd.f32 %v357, %v333
  %v362 = vadd.f32 %v358, %v339
  %363 = vst [vmem:[%s3] sm:$0xff] %v359
  %364 = vst [vmem:[%s3 + $0x8] sm:$0xff] %v360
  %365 = vst [vmem:[%s3 + $0x10] sm:$0xff] %v361
  %366 = vst [vmem:[%s3 + $0x18] sm:$0xff] %v362
  %v367 = vld [vmem:[%s4] sm:$0xff]
  %v368 = vld [vmem:[%s4 + $0x8] sm:$0xff]
  %v369 = vld [vmem:[%s4 + $0x10] sm:$0xff]
  %v370 = vld [vmem:[%s4 + $0x18] sm:$0xff]
  %v371 = vadd.f32 %v367, %v152
  %v372 = vadd.f32 %v368, %v204
  %v373 = vadd.f32 %v369, %v256
  %v374 = vadd.f32 %v370, %v308
  %375 = vst [vmem:[%s4] sm:$0xff] %v371
  %376 = vst [vmem:[%s4 + $0x8] sm:$0xff] %v372
  %377 = vst [vmem:[%s4 + $0x10] sm:$0xff] %v373
  %378 = vst [vmem:[%s4 + $0x18] sm:$0xff] %v374
  %v379 = vld [vmem:[%s5] sm:$0xff]
  %v380 = vld [vmem:[%s5 + $0x8] sm:$0xff]
  %v381 = vld [vmem:[%s5 + $0x10] sm:$0xff]
  %v382 = vld [vmem:[%s5 + $0x18] sm:$0xff]
  %v383 = vadd.f32 %v379, %v151
  %v384 = vadd.f32 %v380, %v203
  %v385 = vadd.f32 %v381, %v255
  %v386 = vadd.f32 %v382, %v307
  %387 = vst [vmem:[%s5] sm:$0xff] %v383
  %388 = vst [vmem:[%s5 + $0x8] sm:$0xff] %v384
  %389 = vst [vmem:[%s5 + $0x10] sm:$0xff] %v385
  %390 = vst [vmem:[%s5 + $0x18] sm:$0xff] %v386
  // Predicated region
  $region14: #{iou_bce_loss.1} parent=0 // pred_check
    _
  $region15: #{iou_bce_loss.1} parent=0 // pred_check_branch
    %392 = sbr.rel (0) target = $region17
  $region16: #{iou_bce_loss.1} parent=0 // pred_region
    _
  $region17: #{iou_bce_loss.1} parent=0 // pred_fallthru
    _
  // Predicated region
  $region18: #{iou_bce_loss.1} parent=0 // pred_check
    _
  $region19: #{iou_bce_loss.1} parent=0 // pred_check_branch
    %394 = sbr.rel (0) target = $region21
  $region20: #{iou_bce_loss.1} parent=0 // pred_region
    _
  $region21: #{iou_bce_loss.1} parent=0 // pred_fallthru
    _
  // Predicated region
  $region22: #{iou_bce_loss.1} parent=0 // pred_check
    _
  $region23: #{iou_bce_loss.1} parent=0 // pred_check_branch
    %396 = sbr.rel (0) target = $region25
  $region24: #{iou_bce_loss.1} parent=0 // pred_region
    _
  $region25: #{iou_bce_loss.1} parent=0 // pred_fallthru
    _
  // Predicated region
  $region26: #{iou_bce_loss.1} parent=0 // pred_check
    _
  $region27: #{iou_bce_loss.1} parent=0 // pred_check_branch
    %398 = sbr.rel (0) target = $region29
  $region28: #{iou_bce_loss.1} parent=0 // pred_region
    _
  $region29: #{iou_bce_loss.1} parent=0 // pred_fallthru
    _
  // Predicated region
  $region30: #{iou_bce_loss.1} parent=0 // pred_check
    _
  $region31: #{iou_bce_loss.1} parent=0 // pred_check_branch
    %400 = sbr.rel (0) target = $region33
  $region32: #{iou_bce_loss.1} parent=0 // pred_region
    _
  $region33: #{iou_bce_loss.1} parent=0 // pred_fallthru
    _
  // Predicated region
  $region34: #{iou_bce_loss.1} parent=0 // pred_check
    _
  $region35: #{iou_bce_loss.1} parent=0 // pred_check_branch
    %402 = sbr.rel (0) target = $region37
  $region36: #{iou_bce_loss.1} parent=0 // pred_region
    _
  $region37: #{iou_bce_loss.1} parent=0 // pred_fallthru
    _
  // Predicated region
  $region38: #{iou_bce_loss.1} parent=0 // pred_check
    _
  $region39: #{iou_bce_loss.1} parent=0 // pred_check_branch
    %404 = sbr.rel (0) target = $region41
  $region40: #{iou_bce_loss.1} parent=0 // pred_region
    _
  $region41: #{iou_bce_loss.1} parent=0 // pred_fallthru
    _
  // Predicated region
  $region42: #{iou_bce_loss.1} parent=0 // pred_check
    _
  $region43: #{iou_bce_loss.1} parent=0 // pred_check_branch
    %406 = sbr.rel (0) target = $region45
  $region44: #{iou_bce_loss.1} parent=0 // pred_region
    _
  $region45: #{iou_bce_loss.1} parent=0 // pred_fallthru
    _

</llo_original>
